<compile_context>
chip_gen: v5e
topology: v5e:2x2
jax: 0.10.0
libtpu: 0.0.40
codegen_flags: <defaults>
</compile_context>

<pallas_src>
import functools

import jax
import jax.numpy as jnp
from jax.experimental import pallas as pl
from jax.experimental.pallas import tpu as pltpu


_VMEM_LIMIT = 32 * 1024 * 1024  # safe scoped limit on v5e / v6e / v7x


def _round_up(x, m):
    return ((x + m - 1) // m) * m


def _choose_tiles(n):
    """Pick (tm, tk, n_pad) with tm | n_pad, tk | n_pad, tm % 8 == tk % 128 == 0."""
    n128 = _round_up(n, 128)
    if n128 <= 512:
        return n128, n128, n128            # small graphs: single tile
    tm, tk = 256, 512                      # bf16 adjacency tile = 256 KiB
    return tm, tk, _round_up(n, tk)


# ---------------------------------------------------------------------------
# kernel A: row-tiled dense feature matmul   O = X @ W   (O(N*F) work, hoisted)
# ---------------------------------------------------------------------------
def _feat_matmul_kernel(x_ref, w_ref, o_ref):
    o_ref[...] = jnp.dot(
        x_ref[...], w_ref[...], preferred_element_type=jnp.float32
    ).astype(o_ref.dtype)


def _feat_matmul(x, w, *, tm, out_dtype):
    n_pad, fin = x.shape
    fout = w.shape[1]
    return pl.pallas_call(
        _feat_matmul_kernel,
        out_shape=jax.ShapeDtypeStruct((n_pad, fout), out_dtype),
        grid_spec=pltpu.PrefetchScalarGridSpec(
            num_scalar_prefetch=0,
            grid=(n_pad // tm,),
            in_specs=[
                pl.BlockSpec((tm, fin), lambda i: (i, 0)),
                pl.BlockSpec((fin, fout), lambda i: (0, 0)),
            ],
            out_specs=pl.BlockSpec((tm, fout), lambda i: (i, 0)),
        ),
        compiler_params=pltpu.CompilerParams(
            dimension_semantics=("parallel",),
            vmem_limit_bytes=_VMEM_LIMIT,
        ),
    )(x, w)


# ---------------------------------------------------------------------------
# kernel B: layer-1 adjacency matmul with fused relu + head projection
#   HW = relu(A_hat @ XW + b1) @ W_heads
# ---------------------------------------------------------------------------
def _layer1_fused_kernel(adj_ref, xw_ref, b1_ref, wh_ref, o_ref, acc_ref):
    k = pl.program_id(1)

    @pl.when(k == 0)
    def _init():
        acc_ref[...] = jnp.zeros_like(acc_ref)

    acc_ref[...] += jnp.dot(
        adj_ref[...], xw_ref[...], preferred_element_type=jnp.float32
    )

    @pl.when(k == pl.num_programs(1) - 1)
    def _finalize():
        h = jnp.maximum(acc_ref[...] + b1_ref[...].astype(jnp.float32), 0.0)
        o_ref[...] = jnp.dot(
            h.astype(wh_ref.dtype), wh_ref[...], preferred_element_type=jnp.float32
        ).astype(o_ref.dtype)


def _layer1_fused(adj, xw, b1, w_heads, *, tm, tk, out_dtype):
    n_pad = adj.shape[0]
    hid = xw.shape[1]
    hout = w_heads.shape[1]
    return pl.pallas_call(
        _layer1_fused_kernel,
        out_shape=jax.ShapeDtypeStruct((n_pad, hout), out_dtype),
        grid_spec=pltpu.PrefetchScalarGridSpec(
            num_scalar_prefetch=0,
            grid=(n_pad // tm, n_pad // tk),
            in_specs=[
                pl.BlockSpec((tm, tk), lambda i, k: (i, k)),      # streamed A_hat tile
                pl.BlockSpec((tk, hid), lambda i, k: (k, 0)),     # XW slab
                pl.BlockSpec((1, hid), lambda i, k: (0, 0)),      # bias row (f32)
                pl.BlockSpec((hid, hout), lambda i, k: (0, 0)),   # fused head weights
            ],
            out_specs=pl.BlockSpec((tm, hout), lambda i, k: (i, 0)),
            scratch_shapes=[pltpu.VMEM((tm, hid), jnp.float32)],
        ),
        compiler_params=pltpu.CompilerParams(
            dimension_semantics=("parallel", "arbitrary"),
            vmem_limit_bytes=_VMEM_LIMIT,
        ),
    )(adj, xw, b1, w_heads)


# ---------------------------------------------------------------------------
# kernel C: layer-2 adjacency matmul   O = A_hat @ HW + bias
# ---------------------------------------------------------------------------
def _adj_spmm_kernel(adj_ref, b_ref, bias_ref, o_ref, acc_ref):
    k = pl.program_id(1)

    @pl.when(k == 0)
    def _init():
        acc_ref[...] = jnp.broadcast_to(
            bias_ref[...].astype(jnp.float32), acc_ref.shape
        )

    acc_ref[...] += jnp.dot(
        adj_ref[...], b_ref[...], preferred_element_type=jnp.float32
    )

    @pl.when(k == pl.num_programs(1) - 1)
    def _finalize():
        o_ref[...] = acc_ref[...].astype(o_ref.dtype)


def _adj_spmm(adj, b, bias, *, tm, tk, out_dtype):
    n_pad = adj.shape[0]
    c = b.shape[1]
    # TODO(synk): block-sparse path (scalar-prefetch a nonzero-tile list and skip
    # all-zero adjacency tiles) for large sparse graphs; dense streaming used here.
    return pl.pallas_call(
        _adj_spmm_kernel,
        out_shape=jax.ShapeDtypeStruct((n_pad, c), out_dtype),
        grid_spec=pltpu.PrefetchScalarGridSpec(
            num_scalar_prefetch=0,
            grid=(n_pad // tm, n_pad // tk),
            in_specs=[
                pl.BlockSpec((tm, tk), lambda i, k: (i, k)),   # streamed A_hat tile
                pl.BlockSpec((tk, c), lambda i, k: (k, 0)),    # HW slab
                pl.BlockSpec((1, c), lambda i, k: (0, 0)),     # bias row (f32)
            ],
            out_specs=pl.BlockSpec((tm, c), lambda i, k: (i, 0)),
            scratch_shapes=[pltpu.VMEM((tm, c), jnp.float32)],
        ),
        compiler_params=pltpu.CompilerParams(
            dimension_semantics=("parallel", "arbitrary"),
            vmem_limit_bytes=_VMEM_LIMIT,
        ),
    )(adj, b, bias)


# ---------------------------------------------------------------------------
# full VGCNEncoder forward pass
# ---------------------------------------------------------------------------
@jax.jit
def vgcn_encoder_pallas(adj_hat, x, params):
    """Returns (mu, logstd), each of shape (N, out_channels)."""
    n = x.shape[0]
    fin = x.shape[1]
    hidden = params["w1"].shape[1]
    out_channels = params["w_mu"].shape[1]
    head = 2 * out_channels

    tm, tk, n_pad = _choose_tiles(n)
    fin_pad = _round_up(fin, 128)
    hid_pad = _round_up(hidden, 128)
    head_pad = _round_up(head, 128)

    # Zero padding is inert: padded adjacency columns / feature columns contribute
    # nothing (relu(0)=0, 0-weight columns), padded rows are sliced off at the end.
    adj_bf = jnp.zeros((n_pad, n_pad), jnp.bfloat16).at[:n, :n].set(
        adj_hat.astype(jnp.bfloat16))
    x_bf = jnp.zeros((n_pad, fin_pad), jnp.bfloat16).at[:n, :fin].set(
        x.astype(jnp.bfloat16))

    # bf16 matmul weights, f32 biases.
    w1 = jnp.zeros((fin_pad, hid_pad), jnp.bfloat16).at[:fin, :hidden].set(
        params["w1"].astype(jnp.bfloat16))
    b1 = jnp.zeros((1, hid_pad), jnp.float32).at[:, :hidden].set(params["b1"])
    w_heads = jnp.concatenate([params["w_mu"], params["w_logstd"]], axis=1)
    w_heads = jnp.zeros((hid_pad, head_pad), jnp.bfloat16).at[:hidden, :head].set(
        w_heads.astype(jnp.bfloat16))
    b_heads = jnp.concatenate([params["b_mu"], params["b_logstd"]], axis=1)
    b_heads = jnp.zeros((1, head_pad), jnp.float32).at[:, :head].set(b_heads)

    # kernel A: XW = X @ W1
    xw = _feat_matmul(x_bf, w1, tm=tm, out_dtype=jnp.bfloat16)

    # kernel B: HW = relu(A_hat @ XW + b1) @ [Wmu|Wls]   (H never hits HBM)
    hw = _layer1_fused(adj_bf, xw, b1, w_heads, tm=tm, tk=tk, out_dtype=jnp.bfloat16)

    # kernel C: [mu|logstd] = A_hat @ HW + [bmu|bls]
    out = _adj_spmm(adj_bf, hw, b_heads, tm=tm, tk=tk, out_dtype=jnp.float32)

    mu = out[:n, :out_channels]
    logstd = out[:n, out_channels:head]
    return mu, logstd


# ---------------------------------------------------------------------------
# plain-JAX glue: dense normalized adjacency + parameter init
# ---------------------------------------------------------------------------
def gcn_normalized_adj(edge_index, num_nodes):
    """Dense A_hat = D^{-1/2} (A + I) D^{-1/2}, matching PyG gcn_norm defaults.

    Self-loops are only added for nodes that do not already have one
    (add_remaining_self_loops semantics), so explicit self-loops in edge_index
    are not double-counted.
    """
    src, dst = edge_index[0], edge_index[1]
    adj = jnp.zeros((num_nodes, num_nodes), dtype=jnp.float32)
    adj = adj.at[dst, src].add(1.0)                 # message flows src -> dst
    diag = jnp.diagonal(adj)
    new_diag = jnp.where(diag > 0.0, diag, 1.0)
    idx = jnp.arange(num_nodes)
    adj = adj.at[idx, idx].set(new_diag)
    deg = jnp.sum(adj, axis=1)
    d_inv_sqrt = jnp.where(deg > 0, 1.0 / jnp.sqrt(deg), 0.0)
    return d_inv_sqrt[:, None] * adj * d_inv_sqrt[None, :]


def init_params(key, in_channels, out_channels):
    hidden = 2 * out_channels
    k1, k2, k3 = jax.random.split(key, 3)

    def glorot(k, fan_in, fan_out):
        scale = jnp.sqrt(6.0 / (fan_in + fan_out))
        return jax.random.uniform(k, (fan_in, fan_out), jnp.float32, -scale, scale)

    return {
        "w1": glorot(k1, in_channels, hidden),
        "b1": jnp.zeros((1, hidden), jnp.float32),
        "w_mu": glorot(k2, hidden, out_channels),
        "b_mu": jnp.zeros((1, out_channels), jnp.float32),
        "w_logstd": glorot(k3, hidden, out_channels),
        "b_logstd": jnp.zeros((1, out_channels), jnp.float32),
    }


if __name__ == "__main__":
    key = jax.random.PRNGKey(0)
    k_x, k_p = jax.random.split(key)

    num_nodes = 16
    in_channels = 8
    out_channels = 4

    # deterministic node features
    x = jax.random.normal(k_x, (num_nodes, in_channels), dtype=jnp.float32)

    # deterministic small ring graph (undirected: both directions listed)
    idx = jnp.arange(num_nodes, dtype=jnp.int32)
    nxt = (idx + 1) % num_nodes
    edge_index = jnp.stack(
        [jnp.concatenate([idx, nxt]), jnp.concatenate([nxt, idx])], axis=0
    )  # (2, 2*N)

    adj_hat = gcn_normalized_adj(edge_index, num_nodes)
    params = init_params(k_p, in_channels, out_channels)

    mu, logstd = vgcn_encoder_pallas(adj_hat, x, params)
    jax.block_until_ready((mu, logstd))

    assert mu.shape == (num_nodes, out_channels)
    assert logstd.shape == (num_nodes, out_channels)

    # pure-JAX f32 reference (loose tolerance: kernel matmul inputs are bf16)
    h_ref = jnp.maximum(adj_hat @ (x @ params["w1"]) + params["b1"], 0.0)
    mu_ref = adj_hat @ (h_ref @ params["w_mu"]) + params["b_mu"]
    ls_ref = adj_hat @ (h_ref @ params["w_logstd"]) + params["b_logstd"]
    assert bool(jnp.all(jnp.isfinite(mu))) and bool(jnp.all(jnp.isfinite(logstd)))
    assert jnp.allclose(mu, mu_ref, atol=5e-2, rtol=5e-2)
    assert jnp.allclose(logstd, ls_ref, atol=5e-2, rtol=5e-2)

    print("KERNEL_OK")
</pallas_src>

<mosaic_0001>
module attributes {stable_mosaic.version = 11 : i64} {
  func.func @_feat_matmul_kernel(%arg0: i32, %arg1: memref<128x128xbf16, #tpu.memory_space<vmem>>, %arg2: memref<128x128xbf16, #tpu.memory_space<vmem>>, %arg3: memref<128x128xbf16, #tpu.memory_space<vmem>>) attributes {dimension_semantics = [#tpu.dimension_semantics<parallel>], iteration_bounds = array<i64: 1>, scalar_prefetch = 0 : i64, scratch_operands = 0 : i64, tpu.core_type = #tpu.core_type<tc>, window_params = [{transform_indices = @transform_0, window_bounds = array<i64: 128, 128>}, {pipeline_mode = #tpu.pipeline_mode<synchronous>, transform_indices = @transform_1, window_bounds = array<i64: 128, 128>}, {transform_indices = @transform_2, window_bounds = array<i64: 128, 128>}]} {
    %c0 = arith.constant 0 : index
    %c0_0 = arith.constant 0 : index
    %0 = vector.load %arg1[%c0, %c0_0] : memref<128x128xbf16, #tpu.memory_space<vmem>>, vector<128x128xbf16>
    %c0_1 = arith.constant 0 : index
    %c0_2 = arith.constant 0 : index
    %1 = vector.load %arg2[%c0_1, %c0_2] : memref<128x128xbf16, #tpu.memory_space<vmem>>, vector<128x128xbf16>
    %cst = arith.constant dense<0.000000e+00> : vector<128x128xf32>
    %2 = tpu.matmul %0, %1, %cst {dimension_numbers = #tpu.dot_dimension_numbers<[1], [0], [0], [1], [0, 0, 1, 1], [], []>} : vector<128x128xbf16>, vector<128x128xbf16>, vector<128x128xf32> -> vector<128x128xf32>
    %3 = arith.truncf %2 : vector<128x128xf32> to vector<128x128xbf16>
    %c0_3 = arith.constant 0 : index
    %c0_4 = arith.constant 0 : index
    %4 = vector.load %arg3[%c0_3, %c0_4] : memref<128x128xbf16, #tpu.memory_space<vmem>>, vector<128x128xbf16>
    tpu.vector_store %arg3[%c0_3, %c0_4], %3 {strides = array<i32>} : memref<128x128xbf16, #tpu.memory_space<vmem>>, vector<128x128xbf16>,
    return
  }
  func.func @transform_0(%arg0: i32) -> (i32, i32) {
    %c0_i32 = arith.constant 0 : i32
    %c0_i32_0 = arith.constant 0 : i32
    return %arg0, %c0_i32 : i32, i32
  }
  func.func @transform_1(%arg0: i32) -> (i32, i32) {
    %c0_i32 = arith.constant 0 : i32
    %c0_i32_0 = arith.constant 0 : i32
    %c0_i32_1 = arith.constant 0 : i32
    return %c0_i32, %c0_i32_0 : i32, i32
  }
  func.func @transform_2(%arg0: i32) -> (i32, i32) {
    %c0_i32 = arith.constant 0 : i32
    %c0_i32_0 = arith.constant 0 : i32
    return %arg0, %c0_i32 : i32, i32
  }
}

module attributes {stable_mosaic.version = 11 : i64} {
  func.func @_layer1_fused_kernel(%arg0: i32, %arg1: i32, %arg2: memref<128x128xbf16, #tpu.memory_space<vmem>>, %arg3: memref<128x128xbf16, #tpu.memory_space<vmem>>, %arg4: memref<1x128xf32, #tpu.memory_space<vmem>>, %arg5: memref<128x128xbf16, #tpu.memory_space<vmem>>, %arg6: memref<128x128xbf16, #tpu.memory_space<vmem>>, %arg7: memref<128x128xf32, #tpu.memory_space<vmem>>) attributes {dimension_semantics = [#tpu.dimension_semantics<parallel>, #tpu.dimension_semantics<arbitrary>], iteration_bounds = array<i64: 1, 1>, scalar_prefetch = 0 : i64, scratch_operands = 1 : i64, tpu.core_type = #tpu.core_type<tc>, window_params = [{transform_indices = @transform_0, window_bounds = array<i64: 128, 128>}, {transform_indices = @transform_1, window_bounds = array<i64: 128, 128>}, {pipeline_mode = #tpu.pipeline_mode<synchronous>, transform_indices = @transform_2, window_bounds = array<i64: 1, 128>}, {pipeline_mode = #tpu.pipeline_mode<synchronous>, transform_indices = @transform_3, window_bounds = array<i64: 128, 128>}, {transform_indices = @transform_4, window_bounds = array<i64: 128, 128>}]} {
    %c0_i32 = arith.constant 0 : i32
    %0 = arith.cmpi eq, %arg1, %c0_i32 : i32
    %1 = arith.extui %0 : i1 to i32
    %c0_i32_0 = arith.constant 0 : i32
    %2 = arith.cmpi ne, %1, %c0_i32_0 : i32
    scf.if %2 {
      %cst_10 = arith.constant 0.000000e+00 : f32
      %12 = vector.broadcast %cst_10 : f32 to vector<128x128xf32>
      %c0_11 = arith.constant 0 : index
      %c0_12 = arith.constant 0 : index
      %13 = vector.load %arg7[%c0_11, %c0_12] : memref<128x128xf32, #tpu.memory_space<vmem>>, vector<128x128xf32>
      tpu.vector_store %arg7[%c0_11, %c0_12], %12 {strides = array<i32>} : memref<128x128xf32, #tpu.memory_space<vmem>>, vector<128x128xf32>,
    } else {
    }
    %c0 = arith.constant 0 : index
    %c0_1 = arith.constant 0 : index
    %3 = vector.load %arg7[%c0, %c0_1] : memref<128x128xf32, #tpu.memory_space<vmem>>, vector<128x128xf32>
    %c0_2 = arith.constant 0 : index
    %c0_3 = arith.constant 0 : index
    %4 = vector.load %arg2[%c0_2, %c0_3] : memref<128x128xbf16, #tpu.memory_space<vmem>>, vector<128x128xbf16>
    %c0_4 = arith.constant 0 : index
    %c0_5 = arith.constant 0 : index
    %5 = vector.load %arg3[%c0_4, %c0_5] : memref<128x128xbf16, #tpu.memory_space<vmem>>, vector<128x128xbf16>
    %cst = arith.constant dense<0.000000e+00> : vector<128x128xf32>
    %6 = tpu.matmul %4, %5, %cst {dimension_numbers = #tpu.dot_dimension_numbers<[1], [0], [0], [1], [0, 0, 1, 1], [], []>} : vector<128x128xbf16>, vector<128x128xbf16>, vector<128x128xf32> -> vector<128x128xf32>
    %7 = arith.addf %3, %6 : vector<128x128xf32>
    %c0_6 = arith.constant 0 : index
    %c0_7 = arith.constant 0 : index
    %8 = vector.load %arg7[%c0_6, %c0_7] : memref<128x128xf32, #tpu.memory_space<vmem>>, vector<128x128xf32>
    tpu.vector_store %arg7[%c0_6, %c0_7], %7 {strides = array<i32>} : memref<128x128xf32, #tpu.memory_space<vmem>>, vector<128x128xf32>,
    %c0_i32_8 = arith.constant 0 : i32
    %9 = arith.cmpi eq, %arg1, %c0_i32_8 : i32
    %10 = arith.extui %9 : i1 to i32
    %c0_i32_9 = arith.constant 0 : i32
    %11 = arith.cmpi ne, %10, %c0_i32_9 : i32
    scf.if %11 {
      %c0_10 = arith.constant 0 : index
      %c0_11 = arith.constant 0 : index
      %12 = vector.load %arg7[%c0_10, %c0_11] : memref<128x128xf32, #tpu.memory_space<vmem>>, vector<128x128xf32>
      %c0_12 = arith.constant 0 : index
      %c0_13 = arith.constant 0 : index
      %13 = vector.load %arg4[%c0_12, %c0_13] : memref<1x128xf32, #tpu.memory_space<vmem>>, vector<1x128xf32>
      %14 = vector.broadcast %13 : vector<1x128xf32> to vector<128x128xf32>
      %15 = arith.addf %12, %14 : vector<128x128xf32>
      %cst_14 = arith.constant 0.000000e+00 : f32
      %16 = vector.broadcast %cst_14 : f32 to vector<128x128xf32>
      %17 = arith.maximumf %15, %16 : vector<128x128xf32>
      %18 = arith.truncf %17 : vector<128x128xf32> to vector<128x128xbf16>
      %c0_15 = arith.constant 0 : index
      %c0_16 = arith.constant 0 : index
      %19 = vector.load %arg5[%c0_15, %c0_16] : memref<128x128xbf16, #tpu.memory_space<vmem>>, vector<128x128xbf16>
      %cst_17 = arith.constant dense<0.000000e+00> : vector<128x128xf32>
      %20 = tpu.matmul %18, %19, %cst_17 {dimension_numbers = #tpu.dot_dimension_numbers<[1], [0], [0], [1], [0, 0, 1, 1], [], []>} : vector<128x128xbf16>, vector<128x128xbf16>, vector<128x128xf32> -> vector<128x128xf32>
      %21 = arith.truncf %20 : vector<128x128xf32> to vector<128x128xbf16>
      %c0_18 = arith.constant 0 : index
      %c0_19 = arith.constant 0 : index
      %22 = vector.load %arg6[%c0_18, %c0_19] : memref<128x128xbf16, #tpu.memory_space<vmem>>, vector<128x128xbf16>
      tpu.vector_store %arg6[%c0_18, %c0_19], %21 {strides = array<i32>} : memref<128x128xbf16, #tpu.memory_space<vmem>>, vector<128x128xbf16>,
    } else {
    }
    return
  }
  func.func @transform_0(%arg0: i32, %arg1: i32) -> (i32, i32) {
    %c0_i32 = arith.constant 0 : i32
    return %arg0, %arg1 : i32, i32
  }
  func.func @transform_1(%arg0: i32, %arg1: i32) -> (i32, i32) {
    %c0_i32 = arith.constant 0 : i32
    %c0_i32_0 = arith.constant 0 : i32
    return %arg1, %c0_i32 : i32, i32
  }
  func.func @transform_2(%arg0: i32, %arg1: i32) -> (i32, i32) {
    %c0_i32 = arith.constant 0 : i32
    %c0_i32_0 = arith.constant 0 : i32
    %c0_i32_1 = arith.constant 0 : i32
    return %c0_i32, %c0_i32_0 : i32, i32
  }
  func.func @transform_3(%arg0: i32, %arg1: i32) -> (i32, i32) {
    %c0_i32 = arith.constant 0 : i32
    %c0_i32_0 = arith.constant 0 : i32
    %c0_i32_1 = arith.constant 0 : i32
    return %c0_i32, %c0_i32_0 : i32, i32
  }
  func.func @transform_4(%arg0: i32, %arg1: i32) -> (i32, i32) {
    %c0_i32 = arith.constant 0 : i32
    %c0_i32_0 = arith.constant 0 : i32
    return %arg0, %c0_i32 : i32, i32
  }
}

module attributes {stable_mosaic.version = 11 : i64} {
  func.func @_adj_spmm_kernel(%arg0: i32, %arg1: i32, %arg2: memref<128x128xbf16, #tpu.memory_space<vmem>>, %arg3: memref<128x128xbf16, #tpu.memory_space<vmem>>, %arg4: memref<1x128xf32, #tpu.memory_space<vmem>>, %arg5: memref<128x128xf32, #tpu.memory_space<vmem>>, %arg6: memref<128x128xf32, #tpu.memory_space<vmem>>) attributes {dimension_semantics = [#tpu.dimension_semantics<parallel>, #tpu.dimension_semantics<arbitrary>], iteration_bounds = array<i64: 1, 1>, scalar_prefetch = 0 : i64, scratch_operands = 1 : i64, tpu.core_type = #tpu.core_type<tc>, window_params = [{transform_indices = @transform_0, window_bounds = array<i64: 128, 128>}, {transform_indices = @transform_1, window_bounds = array<i64: 128, 128>}, {pipeline_mode = #tpu.pipeline_mode<synchronous>, transform_indices = @transform_2, window_bounds = array<i64: 1, 128>}, {transform_indices = @transform_3, window_bounds = array<i64: 128, 128>}]} {
    %c0_i32 = arith.constant 0 : i32
    %0 = arith.cmpi eq, %arg1, %c0_i32 : i32
    %1 = arith.extui %0 : i1 to i32
    %c0_i32_0 = arith.constant 0 : i32
    %2 = arith.cmpi ne, %1, %c0_i32_0 : i32
    scf.if %2 {
      %c0_10 = arith.constant 0 : index
      %c0_11 = arith.constant 0 : index
      %12 = vector.load %arg4[%c0_10, %c0_11] : memref<1x128xf32, #tpu.memory_space<vmem>>, vector<1x128xf32>
      %13 = vector.shape_cast %12 : vector<1x128xf32> to vector<1x128xf32>
      %14 = vector.broadcast %13 : vector<1x128xf32> to vector<128x128xf32>
      %c0_12 = arith.constant 0 : index
      %c0_13 = arith.constant 0 : index
      %15 = vector.load %arg6[%c0_12, %c0_13] : memref<128x128xf32, #tpu.memory_space<vmem>>, vector<128x128xf32>
      tpu.vector_store %arg6[%c0_12, %c0_13], %14 {strides = array<i32>} : memref<128x128xf32, #tpu.memory_space<vmem>>, vector<128x128xf32>,
    } else {
    }
    %c0 = arith.constant 0 : index
    %c0_1 = arith.constant 0 : index
    %3 = vector.load %arg6[%c0, %c0_1] : memref<128x128xf32, #tpu.memory_space<vmem>>, vector<128x128xf32>
    %c0_2 = arith.constant 0 : index
    %c0_3 = arith.constant 0 : index
    %4 = vector.load %arg2[%c0_2, %c0_3] : memref<128x128xbf16, #tpu.memory_space<vmem>>, vector<128x128xbf16>
    %c0_4 = arith.constant 0 : index
    %c0_5 = arith.constant 0 : index
    %5 = vector.load %arg3[%c0_4, %c0_5] : memref<128x128xbf16, #tpu.memory_space<vmem>>, vector<128x128xbf16>
    %cst = arith.constant dense<0.000000e+00> : vector<128x128xf32>
    %6 = tpu.matmul %4, %5, %cst {dimension_numbers = #tpu.dot_dimension_numbers<[1], [0], [0], [1], [0, 0, 1, 1], [], []>} : vector<128x128xbf16>, vector<128x128xbf16>, vector<128x128xf32> -> vector<128x128xf32>
    %7 = arith.addf %3, %6 : vector<128x128xf32>
    %c0_6 = arith.constant 0 : index
    %c0_7 = arith.constant 0 : index
    %8 = vector.load %arg6[%c0_6, %c0_7] : memref<128x128xf32, #tpu.memory_space<vmem>>, vector<128x128xf32>
    tpu.vector_store %arg6[%c0_6, %c0_7], %7 {strides = array<i32>} : memref<128x128xf32, #tpu.memory_space<vmem>>, vector<128x128xf32>,
    %c0_i32_8 = arith.constant 0 : i32
    %9 = arith.cmpi eq, %arg1, %c0_i32_8 : i32
    %10 = arith.extui %9 : i1 to i32
    %c0_i32_9 = arith.constant 0 : i32
    %11 = arith.cmpi ne, %10, %c0_i32_9 : i32
    scf.if %11 {
      %c0_10 = arith.constant 0 : index
      %c0_11 = arith.constant 0 : index
      %12 = vector.load %arg6[%c0_10, %c0_11] : memref<128x128xf32, #tpu.memory_space<vmem>>, vector<128x128xf32>
      %c0_12 = arith.constant 0 : index
      %c0_13 = arith.constant 0 : index
      %13 = vector.load %arg5[%c0_12, %c0_13] : memref<128x128xf32, #tpu.memory_space<vmem>>, vector<128x128xf32>
      tpu.vector_store %arg5[%c0_12, %c0_13], %12 {strides = array<i32>} : memref<128x128xf32, #tpu.memory_space<vmem>>, vector<128x128xf32>,
    } else {
    }
    return
  }
  func.func @transform_0(%arg0: i32, %arg1: i32) -> (i32, i32) {
    %c0_i32 = arith.constant 0 : i32
    return %arg0, %arg1 : i32, i32
  }
  func.func @transform_1(%arg0: i32, %arg1: i32) -> (i32, i32) {
    %c0_i32 = arith.constant 0 : i32
    %c0_i32_0 = arith.constant 0 : i32
    return %arg1, %c0_i32 : i32, i32
  }
  func.func @transform_2(%arg0: i32, %arg1: i32) -> (i32, i32) {
    %c0_i32 = arith.constant 0 : i32
    %c0_i32_0 = arith.constant 0 : i32
    %c0_i32_1 = arith.constant 0 : i32
    return %c0_i32, %c0_i32_0 : i32, i32
  }
  func.func @transform_3(%arg0: i32, %arg1: i32) -> (i32, i32) {
    %c0_i32 = arith.constant 0 : i32
    %c0_i32_0 = arith.constant 0 : i32
    return %arg0, %c0_i32 : i32, i32
  }
}

</mosaic_0001>

<llo_original>
// kernel: vgcn_encoder_pallas.3
$region0: #{vgcn_encoder_pallas.3}
  #allocation0 [shape = 'u32[]', space=smem, size = 0x4, offset = 0x4, fixed_abs, tag = 'smem constant byte address 0x4 - core index']
  #allocation1 [shape = 'u32[72,128]{1,0:T(1,128)}', space=vmem, size = 0x9000, scoped, tag = 'internal scratch']
  %s0 = inlined_call_operand.vmem [shape: bf16[128,128], index: 0, kind: input, shape index: {}]
  %s1 = inlined_call_operand.vmem [shape: bf16[128,128], index: 1, kind: input, shape index: {}]
  %s2 = inlined_call_operand.vmem [shape: bf16[128,128], index: 2, kind: output, shape index: {}]
  %s3 = sld [smem:[#allocation0]]
  $region18: #{vgcn_encoder_pallas.3} parent=0
    _
  %s5 = ssub.s32 1, %s3
  %s6 = scalar_select 0, %s5, %s3
  // Predicated region
  $region2: #{vgcn_encoder_pallas.3} parent=0 // pred_check
    _
  $region3: #{vgcn_encoder_pallas.3} parent=0 // pred_check_branch
    %8 = sbr.rel (0) target = $region5
  $region4: #{vgcn_encoder_pallas.3} parent=0 // pred_region
    _
  $region5: #{vgcn_encoder_pallas.3} parent=0 // pred_fallthru
    _
  // Predicated region
  $region6: #{vgcn_encoder_pallas.3} parent=0 // pred_check
    _
  $region7: #{vgcn_encoder_pallas.3} parent=0 // pred_check_branch
    %10 = sbr.rel (0) target = $region9
  $region8: #{vgcn_encoder_pallas.3} parent=0 // pred_region
    _
  $region9: #{vgcn_encoder_pallas.3} parent=0 // pred_fallthru
    _
  %v11 = vld [vmem:[%s0] sm:$0xf]
  %v12 = vld [vmem:[%s0 + $0x4] sm:$0xf]
  %v13 = vld [vmem:[%s0 + $0x8] sm:$0xf]
  %v14 = vld [vmem:[%s0 + $0xc] sm:$0xf]
  %v15 = vld [vmem:[%s0 + $0x10] sm:$0xf]
  %v16 = vld [vmem:[%s0 + $0x14] sm:$0xf]
  %v17 = vld [vmem:[%s0 + $0x18] sm:$0xf]
  %v18 = vld [vmem:[%s0 + $0x1c] sm:$0xf]
  %v19 = vld [vmem:[%s0 + $0x20] sm:$0xf]
  %v20 = vld [vmem:[%s0 + $0x24] sm:$0xf]
  %v21 = vld [vmem:[%s0 + $0x28] sm:$0xf]
  %v22 = vld [vmem:[%s0 + $0x2c] sm:$0xf]
  %v23 = vld [vmem:[%s0 + $0x30] sm:$0xf]
  %v24 = vld [vmem:[%s0 + $0x34] sm:$0xf]
  %v25 = vld [vmem:[%s0 + $0x38] sm:$0xf]
  %v26 = vld [vmem:[%s0 + $0x3c] sm:$0xf]
  %v27 = vld [vmem:[%s1] sm:$0xf]
  %v28 = vld [vmem:[%s1 + $0x4] sm:$0xf]
  %v29 = vld [vmem:[%s1 + $0x8] sm:$0xf]
  %v30 = vld [vmem:[%s1 + $0xc] sm:$0xf]
  %v31 = vld [vmem:[%s1 + $0x10] sm:$0xf]
  %v32 = vld [vmem:[%s1 + $0x14] sm:$0xf]
  %v33 = vld [vmem:[%s1 + $0x18] sm:$0xf]
  %v34 = vld [vmem:[%s1 + $0x1c] sm:$0xf]
  %v35 = vld [vmem:[%s1 + $0x20] sm:$0xf]
  %v36 = vld [vmem:[%s1 + $0x24] sm:$0xf]
  %v37 = vld [vmem:[%s1 + $0x28] sm:$0xf]
  %v38 = vld [vmem:[%s1 + $0x2c] sm:$0xf]
  %v39 = vld [vmem:[%s1 + $0x30] sm:$0xf]
  %v40 = vld [vmem:[%s1 + $0x34] sm:$0xf]
  %v41 = vld [vmem:[%s1 + $0x38] sm:$0xf]
  %v42 = vld [vmem:[%s1 + $0x3c] sm:$0xf]
  %v59 = vunpack.c.l.b16 %v11
  %v60 = vunpack.c.l.b16 %v12
  %v61 = vunpack.c.l.b16 %v13
  %v62 = vunpack.c.l.b16 %v14
  %v63 = vunpack.c.l.b16 %v15
  %v64 = vunpack.c.l.b16 %v16
  %v65 = vunpack.c.l.b16 %v17
  %v66 = vunpack.c.l.b16 %v18
  %v67 = vunpack.c.l.b16 %v19
  %v68 = vunpack.c.l.b16 %v20
  %v69 = vunpack.c.l.b16 %v21
  %v70 = vunpack.c.l.b16 %v22
  %v71 = vunpack.c.l.b16 %v23
  %v72 = vunpack.c.l.b16 %v24
  %v73 = vunpack.c.l.b16 %v25
  %v74 = vunpack.c.l.b16 %v26
  %v75 = vpack.c.b16 %v60, %v59
  %v76 = vpack.c.b16 %v62, %v61
  %v77 = vpack.c.b16 %v64, %v63
  %v78 = vpack.c.b16 %v66, %v65
  %v79 = vpack.c.b16 %v68, %v67
  %v80 = vpack.c.b16 %v70, %v69
  %v81 = vpack.c.b16 %v72, %v71
  %v82 = vpack.c.b16 %v74, %v73
  %v107 = vunpack.c.l.b16 %v27
  %v108 = vunpack.c.l.b16 %v28
  %v109 = vunpack.c.l.b16 %v29
  %v110 = vunpack.c.l.b16 %v30
  %v111 = vunpack.c.l.b16 %v31
  %v112 = vunpack.c.l.b16 %v32
  %v113 = vunpack.c.l.b16 %v33
  %v114 = vunpack.c.l.b16 %v34
  %v115 = vunpack.c.l.b16 %v35
  %v116 = vunpack.c.l.b16 %v36
  %v117 = vunpack.c.l.b16 %v37
  %v118 = vunpack.c.l.b16 %v38
  %v119 = vunpack.c.l.b16 %v39
  %v120 = vunpack.c.l.b16 %v40
  %v121 = vunpack.c.l.b16 %v41
  %v122 = vunpack.c.l.b16 %v42
  %v123 = vpack.c.b16 %v108, %v107
  %v124 = vpack.c.b16 %v110, %v109
  %v125 = vpack.c.b16 %v112, %v111
  %v126 = vpack.c.b16 %v114, %v113
  %v127 = vpack.c.b16 %v116, %v115
  %v128 = vpack.c.b16 %v118, %v117
  %v129 = vpack.c.b16 %v120, %v119
  %v130 = vpack.c.b16 %v122, %v121
  %139 = vmatpush.bf16.msra.mxu0 %v130
  %140 = vmatpush.bf16.msra.mxu0 %v129
  %141 = vmatpush.bf16.msra.mxu0 %v128
  %142 = vmatpush.bf16.msra.mxu0 %v127
  %143 = vmatpush.bf16.msra.mxu0 %v126
  %144 = vmatpush.bf16.msra.mxu0 %v125
  %145 = vmatpush.bf16.msra.mxu0 %v124
  %146 = vmatpush.bf16.msra.mxu0 %v123
  %147 = vmatmul.bf16.gmra.mxu0 %v75
  %v148 = vpop.f32.mrf.mxu0
  %v149 = vadd.f32 0.0, %v148
  %v150 = vpop.f32.mrf.mxu0
  %v151 = vadd.f32 0.0, %v150
  %152 = vmatmul.bf16.gmra.mxu0 %v76
  %v153 = vpop.f32.mrf.mxu0
  %v154 = vadd.f32 0.0, %v153
  %v155 = vpop.f32.mrf.mxu0
  %v156 = vadd.f32 0.0, %v155
  %157 = vmatmul.bf16.gmra.mxu0 %v77
  %v158 = vpop.f32.mrf.mxu0
  %v159 = vadd.f32 0.0, %v158
  %v160 = vpop.f32.mrf.mxu0
  %v161 = vadd.f32 0.0, %v160
  %162 = vmatmul.bf16.gmra.mxu0 %v78
  %v163 = vpop.f32.mrf.mxu0
  %v164 = vadd.f32 0.0, %v163
  %v165 = vpop.f32.mrf.mxu0
  %v166 = vadd.f32 0.0, %v165
  %167 = vmatmul.bf16.gmra.mxu0 %v79
  %v168 = vpop.f32.mrf.mxu0
  %v169 = vadd.f32 0.0, %v168
  %v170 = vpop.f32.mrf.mxu0
  %v171 = vadd.f32 0.0, %v170
  %172 = vmatmul.bf16.gmra.mxu0 %v80
  %v173 = vpop.f32.mrf.mxu0
  %v174 = vadd.f32 0.0, %v173
  %v175 = vpop.f32.mrf.mxu0
  %v176 = vadd.f32 0.0, %v175
  %177 = vmatmul.bf16.gmra.mxu0 %v81
  %v178 = vpop.f32.mrf.mxu0
  %v179 = vadd.f32 0.0, %v178
  %v180 = vpop.f32.mrf.mxu0
  %v181 = vadd.f32 0.0, %v180
  %182 = vmatmul.bf16.gmra.mxu0 %v82
  %v183 = vpop.f32.mrf.mxu0
  %v184 = vadd.f32 0.0, %v183
  %v185 = vpop.f32.mrf.mxu0
  %v186 = vadd.f32 0.0, %v185
  %187 = vdwg.mxu0
  %v188 = vpack.c.bf16 %v149, %v149
  %v189 = vpack.c.bf16 %v151, %v151
  %v190 = vpack.c.bf16 %v154, %v154
  %v191 = vpack.c.bf16 %v156, %v156
  %v192 = vpack.c.bf16 %v159, %v159
  %v193 = vpack.c.bf16 %v161, %v161
  %v194 = vpack.c.bf16 %v164, %v164
  %v195 = vpack.c.bf16 %v166, %v166
  %v196 = vpack.c.bf16 %v169, %v169
  %v197 = vpack.c.bf16 %v171, %v171
  %v198 = vpack.c.bf16 %v174, %v174
  %v199 = vpack.c.bf16 %v176, %v176
  %v200 = vpack.c.bf16 %v179, %v179
  %v201 = vpack.c.bf16 %v181, %v181
  %v202 = vpack.c.bf16 %v184, %v184
  %v203 = vpack.c.bf16 %v186, %v186
  %204 = vst [vmem:[%s2] sm:$0xf] %v188
  %205 = vst [vmem:[%s2 + $0x4] sm:$0xf] %v189
  %206 = vst [vmem:[%s2 + $0x8] sm:$0xf] %v190
  %207 = vst [vmem:[%s2 + $0xc] sm:$0xf] %v191
  %208 = vst [vmem:[%s2 + $0x10] sm:$0xf] %v192
  %209 = vst [vmem:[%s2 + $0x14] sm:$0xf] %v193
  %210 = vst [vmem:[%s2 + $0x18] sm:$0xf] %v194
  %211 = vst [vmem:[%s2 + $0x1c] sm:$0xf] %v195
  %212 = vst [vmem:[%s2 + $0x20] sm:$0xf] %v196
  %213 = vst [vmem:[%s2 + $0x24] sm:$0xf] %v197
  %214 = vst [vmem:[%s2 + $0x28] sm:$0xf] %v198
  %215 = vst [vmem:[%s2 + $0x2c] sm:$0xf] %v199
  %216 = vst [vmem:[%s2 + $0x30] sm:$0xf] %v200
  %217 = vst [vmem:[%s2 + $0x34] sm:$0xf] %v201
  %218 = vst [vmem:[%s2 + $0x38] sm:$0xf] %v202
  %219 = vst [vmem:[%s2 + $0x3c] sm:$0xf] %v203
  // Predicated region
  $region10: #{vgcn_encoder_pallas.3} parent=0 // pred_check
    _
  $region11: #{vgcn_encoder_pallas.3} parent=0 // pred_check_branch
    %221 = sbr.rel (0) target = $region13
  $region12: #{vgcn_encoder_pallas.3} parent=0 // pred_region
    _
  $region13: #{vgcn_encoder_pallas.3} parent=0 // pred_fallthru
    _
  // Predicated region
  $region14: #{vgcn_encoder_pallas.3} parent=0 // pred_check
    _
  $region15: #{vgcn_encoder_pallas.3} parent=0 // pred_check_branch
    %223 = sbr.rel (0) target = $region17
  $region16: #{vgcn_encoder_pallas.3} parent=0 // pred_region
    _
  $region17: #{vgcn_encoder_pallas.3} parent=0 // pred_fallthru
    _

// kernel: vgcn_encoder_pallas.5
$region0: #{vgcn_encoder_pallas.5}
  #allocation0 [shape = 'u32[]', space=smem, size = 0x4, offset = 0x4, fixed_abs, tag = 'smem constant byte address 0x4 - core index']
  #allocation1 [shape = 'u32[72,128]{1,0:T(1,128)}', space=vmem, size = 0x9000, scoped, tag = 'internal scratch']
  #allocation2 [shape = 'f32[128,128]{1,0:T(8,128)}', space=vmem, size = 0x10000, scoped, tag = 'scratch operand']
  %s0 = inlined_call_operand.vmem [shape: bf16[128,128], index: 0, kind: input, shape index: {}]
  %s1 = inlined_call_operand.vmem [shape: bf16[128,128], index: 1, kind: input, shape index: {}]
  %s2 = inlined_call_operand.vmem [shape: f32[1,128], index: 2, kind: input, shape index: {}]
  %s3 = inlined_call_operand.vmem [shape: f32[128,128], index: 3, kind: output, shape index: {}]
  %s4 = sld [smem:[#allocation0]]
  $region30: #{vgcn_encoder_pallas.5} parent=0
    _
  %s6 = ssub.s32 1, %s4
  %s7 = scalar_select 0, %s6, %s4
  // Predicated region
  $region2: #{vgcn_encoder_pallas.5} parent=0 // pred_check
    _
  $region3: #{vgcn_encoder_pallas.5} parent=0 // pred_check_branch
    %9 = sbr.rel (0) target = $region5
  $region4: #{vgcn_encoder_pallas.5} parent=0 // pred_region
    _
  $region5: #{vgcn_encoder_pallas.5} parent=0 // pred_fallthru
    _
  // Predicated region
  $region6: #{vgcn_encoder_pallas.5} parent=0 // pred_check
    _
  $region7: #{vgcn_encoder_pallas.5} parent=0 // pred_check_branch
    %11 = sbr.rel (0) target = $region9
  $region8: #{vgcn_encoder_pallas.5} parent=0 // pred_region
    _
  $region9: #{vgcn_encoder_pallas.5} parent=0 // pred_fallthru
    _
  // Predicated region
  $region10: #{vgcn_encoder_pallas.5} parent=0 // pred_check
    _
  $region11: #{vgcn_encoder_pallas.5} parent=0 // pred_check_branch
    %13 = sbr.rel (0) target = $region13
  $region12: #{vgcn_encoder_pallas.5} parent=0 // pred_region
    _
  $region13: #{vgcn_encoder_pallas.5} parent=0 // pred_fallthru
    _
  %p14 = scmp.eq.s32.totalorder 0, 0
  // Predicated region
  $region14: #{vgcn_encoder_pallas.5} parent=0 // pred_check
    %p15 = pneg %p14
  $region15: #{vgcn_encoder_pallas.5} parent=0 // pred_check_branch
    %17 = sbr.rel (%p15) target = $region17
  $region16: #{vgcn_encoder_pallas.5} parent=0 // pred_region
    %v18 = vld [vmem:[%s2] sm:$0x1]
    %v20 = vperm.slane %v18, 0
    %22 = vst [vmem:[#allocation2] sm:$0xff] %v20
    %23 = vst [vmem:[#allocation2 + $0x8] sm:$0xff] %v20
    %24 = vst [vmem:[#allocation2 + $0x10] sm:$0xff] %v20
    %25 = vst [vmem:[#allocation2 + $0x18] sm:$0xff] %v20
    %26 = vst [vmem:[#allocation2 + $0x20] sm:$0xff] %v20
    %27 = vst [vmem:[#allocation2 + $0x28] sm:$0xff] %v20
    %28 = vst [vmem:[#allocation2 + $0x30] sm:$0xff] %v20
    %29 = vst [vmem:[#allocation2 + $0x38] sm:$0xff] %v20
    %30 = vst [vmem:[#allocation2 + $0x40] sm:$0xff] %v20
    %31 = vst [vmem:[#allocation2 + $0x48] sm:$0xff] %v20
    %32 = vst [vmem:[#allocation2 + $0x50] sm:$0xff] %v20
    %33 = vst [vmem:[#allocation2 + $0x58] sm:$0xff] %v20
    %34 = vst [vmem:[#allocation2 + $0x60] sm:$0xff] %v20
    %35 = vst [vmem:[#allocation2 + $0x68] sm:$0xff] %v20
    %36 = vst [vmem:[#allocation2 + $0x70] sm:$0xff] %v20
    %37 = vst [vmem:[#allocation2 + $0x78] sm:$0xff] %v20
  $region17: #{vgcn_encoder_pallas.5} parent=0 // pred_fallthru
    _
  %v38 = vld [vmem:[#allocation2] sm:$0xff]
  %v39 = vld [vmem:[#allocation2 + $0x8] sm:$0xff]
  %v40 = vld [vmem:[#allocation2 + $0x10] sm:$0xff]
  %v41 = vld [vmem:[#allocation2 + $0x18] sm:$0xff]
  %v42 = vld [vmem:[#allocation2 + $0x20] sm:$0xff]
  %v43 = vld [vmem:[#allocation2 + $0x28] sm:$0xff]
  %v44 = vld [vmem:[#allocation2 + $0x30] sm:$0xff]
  %v45 = vld [vmem:[#allocation2 + $0x38] sm:$0xff]
  %v46 = vld [vmem:[#allocation2 + $0x40] sm:$0xff]
  %v47 = vld [vmem:[#allocation2 + $0x48] sm:$0xff]
  %v48 = vld [vmem:[#allocation2 + $0x50] sm:$0xff]
  %v49 = vld [vmem:[#allocation2 + $0x58] sm:$0xff]
  %v50 = vld [vmem:[#allocation2 + $0x60] sm:$0xff]
  %v51 = vld [vmem:[#allocation2 + $0x68] sm:$0xff]
  %v52 = vld [vmem:[#allocation2 + $0x70] sm:$0xff]
  %v53 = vld [vmem:[#allocation2 + $0x78] sm:$0xff]
  %v54 = vld [vmem:[%s0] sm:$0xf]
  %v55 = vld [vmem:[%s0 + $0x4] sm:$0xf]
  %v56 = vld [vmem:[%s0 + $0x8] sm:$0xf]
  %v57 = vld [vmem:[%s0 + $0xc] sm:$0xf]
  %v58 = vld [vmem:[%s0 + $0x10] sm:$0xf]
  %v59 = vld [vmem:[%s0 + $0x14] sm:$0xf]
  %v60 = vld [vmem:[%s0 + $0x18] sm:$0xf]
  %v61 = vld [vmem:[%s0 + $0x1c] sm:$0xf]
  %v62 = vld [vmem:[%s0 + $0x20] sm:$0xf]
  %v63 = vld [vmem:[%s0 + $0x24] sm:$0xf]
  %v64 = vld [vmem:[%s0 + $0x28] sm:$0xf]
  %v65 = vld [vmem:[%s0 + $0x2c] sm:$0xf]
  %v66 = vld [vmem:[%s0 + $0x30] sm:$0xf]
  %v67 = vld [vmem:[%s0 + $0x34] sm:$0xf]
  %v68 = vld [vmem:[%s0 + $0x38] sm:$0xf]
  %v69 = vld [vmem:[%s0 + $0x3c] sm:$0xf]
  %v70 = vld [vmem:[%s1] sm:$0xf]
  %v71 = vld [vmem:[%s1 + $0x4] sm:$0xf]
  %v72 = vld [vmem:[%s1 + $0x8] sm:$0xf]
  %v73 = vld [vmem:[%s1 + $0xc] sm:$0xf]
  %v74 = vld [vmem:[%s1 + $0x10] sm:$0xf]
  %v75 = vld [vmem:[%s1 + $0x14] sm:$0xf]
  %v76 = vld [vmem:[%s1 + $0x18] sm:$0xf]
  %v77 = vld [vmem:[%s1 + $0x1c] sm:$0xf]
  %v78 = vld [vmem:[%s1 + $0x20] sm:$0xf]
  %v79 = vld [vmem:[%s1 + $0x24] sm:$0xf]
  %v80 = vld [vmem:[%s1 + $0x28] sm:$0xf]
  %v81 = vld [vmem:[%s1 + $0x2c] sm:$0xf]
  %v82 = vld [vmem:[%s1 + $0x30] sm:$0xf]
  %v83 = vld [vmem:[%s1 + $0x34] sm:$0xf]
  %v84 = vld [vmem:[%s1 + $0x38] sm:$0xf]
  %v85 = vld [vmem:[%s1 + $0x3c] sm:$0xf]
  %v102 = vunpack.c.l.b16 %v54
  %v103 = vunpack.c.l.b16 %v55
  %v104 = vunpack.c.l.b16 %v56
  %v105 = vunpack.c.l.b16 %v57
  %v106 = vunpack.c.l.b16 %v58
  %v107 = vunpack.c.l.b16 %v59
  %v108 = vunpack.c.l.b16 %v60
  %v109 = vunpack.c.l.b16 %v61
  %v110 = vunpack.c.l.b16 %v62
  %v111 = vunpack.c.l.b16 %v63
  %v112 = vunpack.c.l.b16 %v64
  %v113 = vunpack.c.l.b16 %v65
  %v114 = vunpack.c.l.b16 %v66
  %v115 = vunpack.c.l.b16 %v67
  %v116 = vunpack.c.l.b16 %v68
  %v117 = vunpack.c.l.b16 %v69
  %v118 = vpack.c.b16 %v103, %v102
  %v119 = vpack.c.b16 %v105, %v104
  %v120 = vpack.c.b16 %v107, %v106
  %v121 = vpack.c.b16 %v109, %v108
  %v122 = vpack.c.b16 %v111, %v110
  %v123 = vpack.c.b16 %v113, %v112
  %v124 = vpack.c.b16 %v115, %v114
  %v125 = vpack.c.b16 %v117, %v116
  %v150 = vunpack.c.l.b16 %v70
  %v151 = vunpack.c.l.b16 %v71
  %v152 = vunpack.c.l.b16 %v72
  %v153 = vunpack.c.l.b16 %v73
  %v154 = vunpack.c.l.b16 %v74
  %v155 = vunpack.c.l.b16 %v75
  %v156 = vunpack.c.l.b16 %v76
  %v157 = vunpack.c.l.b16 %v77
  %v158 = vunpack.c.l.b16 %v78
  %v159 = vunpack.c.l.b16 %v79
  %v160 = vunpack.c.l.b16 %v80
  %v161 = vunpack.c.l.b16 %v81
  %v162 = vunpack.c.l.b16 %v82
  %v163 = vunpack.c.l.b16 %v83
  %v164 = vunpack.c.l.b16 %v84
  %v165 = vunpack.c.l.b16 %v85
  %v166 = vpack.c.b16 %v151, %v150
  %v167 = vpack.c.b16 %v153, %v152
  %v168 = vpack.c.b16 %v155, %v154
  %v169 = vpack.c.b16 %v157, %v156
  %v170 = vpack.c.b16 %v159, %v158
  %v171 = vpack.c.b16 %v161, %v160
  %v172 = vpack.c.b16 %v163, %v162
  %v173 = vpack.c.b16 %v165, %v164
  %182 = vmatpush.bf16.msra.mxu0 %v173
  %183 = vmatpush.bf16.msra.mxu0 %v172
  %184 = vmatpush.bf16.msra.mxu0 %v171
  %185 = vmatpush.bf16.msra.mxu0 %v170
  %186 = vmatpush.bf16.msra.mxu0 %v169
  %187 = vmatpush.bf16.msra.mxu0 %v168
  %188 = vmatpush.bf16.msra.mxu0 %v167
  %189 = vmatpush.bf16.msra.mxu0 %v166
  %190 = vmatmul.bf16.gmra.mxu0 %v118
  %v191 = vpop.f32.mrf.mxu0
  %v192 = vadd.f32 0.0, %v191
  %v193 = vpop.f32.mrf.mxu0
  %v194 = vadd.f32 0.0, %v193
  %195 = vmatmul.bf16.gmra.mxu0 %v119
  %v196 = vpop.f32.mrf.mxu0
  %v197 = vadd.f32 0.0, %v196
  %v198 = vpop.f32.mrf.mxu0
  %v199 = vadd.f32 0.0, %v198
  %200 = vmatmul.bf16.gmra.mxu0 %v120
  %v201 = vpop.f32.mrf.mxu0
  %v202 = vadd.f32 0.0, %v201
  %v203 = vpop.f32.mrf.mxu0
  %v204 = vadd.f32 0.0, %v203
  %205 = vmatmul.bf16.gmra.mxu0 %v121
  %v206 = vpop.f32.mrf.mxu0
  %v207 = vadd.f32 0.0, %v206
  %v208 = vpop.f32.mrf.mxu0
  %v209 = vadd.f32 0.0, %v208
  %210 = vmatmul.bf16.gmra.mxu0 %v122
  %v211 = vpop.f32.mrf.mxu0
  %v212 = vadd.f32 0.0, %v211
  %v213 = vpop.f32.mrf.mxu0
  %v214 = vadd.f32 0.0, %v213
  %215 = vmatmul.bf16.gmra.mxu0 %v123
  %v216 = vpop.f32.mrf.mxu0
  %v217 = vadd.f32 0.0, %v216
  %v218 = vpop.f32.mrf.mxu0
  %v219 = vadd.f32 0.0, %v218
  %220 = vmatmul.bf16.gmra.mxu0 %v124
  %v221 = vpop.f32.mrf.mxu0
  %v222 = vadd.f32 0.0, %v221
  %v223 = vpop.f32.mrf.mxu0
  %v224 = vadd.f32 0.0, %v223
  %225 = vmatmul.bf16.gmra.mxu0 %v125
  %v226 = vpop.f32.mrf.mxu0
  %v227 = vadd.f32 0.0, %v226
  %v228 = vpop.f32.mrf.mxu0
  %v229 = vadd.f32 0.0, %v228
  %230 = vdwg.mxu0
  %v231 = vadd.f32 %v38, %v192
  %v232 = vadd.f32 %v39, %v194
  %v233 = vadd.f32 %v40, %v197
  %v234 = vadd.f32 %v41, %v199
  %v235 = vadd.f32 %v42, %v202
  %v236 = vadd.f32 %v43, %v204
  %v237 = vadd.f32 %v44, %v207
  %v238 = vadd.f32 %v45, %v209
  %v239 = vadd.f32 %v46, %v212
  %v240 = vadd.f32 %v47, %v214
  %v241 = vadd.f32 %v48, %v217
  %v242 = vadd.f32 %v49, %v219
  %v243 = vadd.f32 %v50, %v222
  %v244 = vadd.f32 %v51, %v224
  %v245 = vadd.f32 %v52, %v227
  %v246 = vadd.f32 %v53, %v229
  %247 = vst [vmem:[#allocation2] sm:$0xff] %v231
  %248 = vst [vmem:[#allocation2 + $0x8] sm:$0xff] %v232
  %249 = vst [vmem:[#allocation2 + $0x10] sm:$0xff] %v233
  %250 = vst [vmem:[#allocation2 + $0x18] sm:$0xff] %v234
  %251 = vst [vmem:[#allocation2 + $0x20] sm:$0xff] %v235
  %252 = vst [vmem:[#allocation2 + $0x28] sm:$0xff] %v236
  %253 = vst [vmem:[#allocation2 + $0x30] sm:$0xff] %v237
  %254 = vst [vmem:[#allocation2 + $0x38] sm:$0xff] %v238
  %255 = vst [vmem:[#allocation2 + $0x40] sm:$0xff] %v239
  %256 = vst [vmem:[#allocation2 + $0x48] sm:$0xff] %v240
  %257 = vst [vmem:[#allocation2 + $0x50] sm:$0xff] %v241
  %258 = vst [vmem:[#allocation2 + $0x58] sm:$0xff] %v242
  %259 = vst [vmem:[#allocation2 + $0x60] sm:$0xff] %v243
  %260 = vst [vmem:[#allocation2 + $0x68] sm:$0xff] %v244
  %261 = vst [vmem:[#allocation2 + $0x70] sm:$0xff] %v245
  %262 = vst [vmem:[#allocation2 + $0x78] sm:$0xff] %v246
  // Predicated region
  $region18: #{vgcn_encoder_pallas.5} parent=0 // pred_check
    %p263 = pneg %p14
  $region19: #{vgcn_encoder_pallas.5} parent=0 // pred_check_branch
    %265 = sbr.rel (%p263) target = $region21
  $region20: #{vgcn_encoder_pallas.5} parent=0 // pred_region
    %v266 = vld [vmem:[#allocation2] sm:$0xff]
    %v267 = vld [vmem:[#allocation2 + $0x8] sm:$0xff]
    %v268 = vld [vmem:[#allocation2 + $0x10] sm:$0xff]
    %v269 = vld [vmem:[#allocation2 + $0x18] sm:$0xff]
    %v270 = vld [vmem:[#allocation2 + $0x20] sm:$0xff]
    %v271 = vld [vmem:[#allocation2 + $0x28] sm:$0xff]
    %v272 = vld [vmem:[#allocation2 + $0x30] sm:$0xff]
    %v273 = vld [vmem:[#allocation2 + $0x38] sm:$0xff]
    %v274 = vld [vmem:[#allocation2 + $0x40] sm:$0xff]
    %v275 = vld [vmem:[#allocation2 + $0x48] sm:$0xff]
    %v276 = vld [vmem:[#allocation2 + $0x50] sm:$0xff]
    %v277 = vld [vmem:[#allocation2 + $0x58] sm:$0xff]
    %v278 = vld [vmem:[#allocation2 + $0x60] sm:$0xff]
    %v279 = vld [vmem:[#allocation2 + $0x68] sm:$0xff]
    %v280 = vld [vmem:[#allocation2 + $0x70] sm:$0xff]
    %v281 = vld [vmem:[#allocation2 + $0x78] sm:$0xff]
    %282 = vst [vmem:[%s3] sm:$0xff] %v266
    %283 = vst [vmem:[%s3 + $0x8] sm:$0xff] %v267
    %284 = vst [vmem:[%s3 + $0x10] sm:$0xff] %v268
    %285 = vst [vmem:[%s3 + $0x18] sm:$0xff] %v269
    %286 = vst [vmem:[%s3 + $0x20] sm:$0xff] %v270
    %287 = vst [vmem:[%s3 + $0x28] sm:$0xff] %v271
    %288 = vst [vmem:[%s3 + $0x30] sm:$0xff] %v272
    %289 = vst [vmem:[%s3 + $0x38] sm:$0xff] %v273
    %290 = vst [vmem:[%s3 + $0x40] sm:$0xff] %v274
    %291 = vst [vmem:[%s3 + $0x48] sm:$0xff] %v275
    %292 = vst [vmem:[%s3 + $0x50] sm:$0xff] %v276
    %293 = vst [vmem:[%s3 + $0x58] sm:$0xff] %v277
    %294 = vst [vmem:[%s3 + $0x60] sm:$0xff] %v278
    %295 = vst [vmem:[%s3 + $0x68] sm:$0xff] %v279
    %296 = vst [vmem:[%s3 + $0x70] sm:$0xff] %v280
    %297 = vst [vmem:[%s3 + $0x78] sm:$0xff] %v281
  $region21: #{vgcn_encoder_pallas.5} parent=0 // pred_fallthru
    _
  // Predicated region
  $region22: #{vgcn_encoder_pallas.5} parent=0 // pred_check
    _
  $region23: #{vgcn_encoder_pallas.5} parent=0 // pred_check_branch
    %299 = sbr.rel (0) target = $region25
  $region24: #{vgcn_encoder_pallas.5} parent=0 // pred_region
    _
  $region25: #{vgcn_encoder_pallas.5} parent=0 // pred_fallthru
    _
  // Predicated region
  $region26: #{vgcn_encoder_pallas.5} parent=0 // pred_check
    _
  $region27: #{vgcn_encoder_pallas.5} parent=0 // pred_check_branch
    %301 = sbr.rel (0) target = $region29
  $region28: #{vgcn_encoder_pallas.5} parent=0 // pred_region
    _
  $region29: #{vgcn_encoder_pallas.5} parent=0 // pred_fallthru
    _

// kernel: vgcn_encoder_pallas.4
$region0: #{vgcn_encoder_pallas.4}
  #allocation0 [shape = 'u32[]', space=smem, size = 0x4, offset = 0x4, fixed_abs, tag = 'smem constant byte address 0x4 - core index']
  #allocation1 [shape = 'u32[72,128]{1,0:T(1,128)}', space=vmem, size = 0x9000, scoped, tag = 'internal scratch']
  #allocation2 [shape = 'f32[128,128]{1,0:T(8,128)}', space=vmem, size = 0x10000, scoped, tag = 'scratch operand']
  %s0 = inlined_call_operand.vmem [shape: bf16[128,128], index: 0, kind: input, shape index: {}]
  %s1 = inlined_call_operand.vmem [shape: bf16[128,128], index: 1, kind: input, shape index: {}]
  %s2 = inlined_call_operand.vmem [shape: f32[1,128], index: 2, kind: input, shape index: {}]
  %s3 = inlined_call_operand.vmem [shape: bf16[128,128], index: 3, kind: input, shape index: {}]
  %s4 = inlined_call_operand.vmem [shape: bf16[128,128], index: 4, kind: output, shape index: {}]
  %s5 = sld [smem:[#allocation0]]
  $region34: #{vgcn_encoder_pallas.4} parent=0
    _
  %s7 = ssub.s32 1, %s5
  %s8 = scalar_select 0, %s7, %s5
  // Predicated region
  $region2: #{vgcn_encoder_pallas.4} parent=0 // pred_check
    _
  $region3: #{vgcn_encoder_pallas.4} parent=0 // pred_check_branch
    %10 = sbr.rel (0) target = $region5
  $region4: #{vgcn_encoder_pallas.4} parent=0 // pred_region
    _
  $region5: #{vgcn_encoder_pallas.4} parent=0 // pred_fallthru
    _
  // Predicated region
  $region6: #{vgcn_encoder_pallas.4} parent=0 // pred_check
    _
  $region7: #{vgcn_encoder_pallas.4} parent=0 // pred_check_branch
    %12 = sbr.rel (0) target = $region9
  $region8: #{vgcn_encoder_pallas.4} parent=0 // pred_region
    _
  $region9: #{vgcn_encoder_pallas.4} parent=0 // pred_fallthru
    _
  // Predicated region
  $region10: #{vgcn_encoder_pallas.4} parent=0 // pred_check
    _
  $region11: #{vgcn_encoder_pallas.4} parent=0 // pred_check_branch
    %14 = sbr.rel (0) target = $region13
  $region12: #{vgcn_encoder_pallas.4} parent=0 // pred_region
    _
  $region13: #{vgcn_encoder_pallas.4} parent=0 // pred_fallthru
    _
  // Predicated region
  $region14: #{vgcn_encoder_pallas.4} parent=0 // pred_check
    _
  $region15: #{vgcn_encoder_pallas.4} parent=0 // pred_check_branch
    %16 = sbr.rel (0) target = $region17
  $region16: #{vgcn_encoder_pallas.4} parent=0 // pred_region
    _
  $region17: #{vgcn_encoder_pallas.4} parent=0 // pred_fallthru
    _
  %p17 = scmp.eq.s32.totalorder 0, 0
  // Predicated region
  $region18: #{vgcn_encoder_pallas.4} parent=0 // pred_check
    %p18 = pneg %p17
  $region19: #{vgcn_encoder_pallas.4} parent=0 // pred_check_branch
    %20 = sbr.rel (%p18) target = $region21
  $region20: #{vgcn_encoder_pallas.4} parent=0 // pred_region
    %21 = vst [vmem:[#allocation2] sm:$0xff] 0.0
    %22 = vst [vmem:[#allocation2 + $0x8] sm:$0xff] 0.0
    %23 = vst [vmem:[#allocation2 + $0x10] sm:$0xff] 0.0
    %24 = vst [vmem:[#allocation2 + $0x18] sm:$0xff] 0.0
    %25 = vst [vmem:[#allocation2 + $0x20] sm:$0xff] 0.0
    %26 = vst [vmem:[#allocation2 + $0x28] sm:$0xff] 0.0
    %27 = vst [vmem:[#allocation2 + $0x30] sm:$0xff] 0.0
    %28 = vst [vmem:[#allocation2 + $0x38] sm:$0xff] 0.0
    %29 = vst [vmem:[#allocation2 + $0x40] sm:$0xff] 0.0
    %30 = vst [vmem:[#allocation2 + $0x48] sm:$0xff] 0.0
    %31 = vst [vmem:[#allocation2 + $0x50] sm:$0xff] 0.0
    %32 = vst [vmem:[#allocation2 + $0x58] sm:$0xff] 0.0
    %33 = vst [vmem:[#allocation2 + $0x60] sm:$0xff] 0.0
    %34 = vst [vmem:[#allocation2 + $0x68] sm:$0xff] 0.0
    %35 = vst [vmem:[#allocation2 + $0x70] sm:$0xff] 0.0
    %36 = vst [vmem:[#allocation2 + $0x78] sm:$0xff] 0.0
  $region21: #{vgcn_encoder_pallas.4} parent=0 // pred_fallthru
    _
  %v37 = vld [vmem:[#allocation2] sm:$0xff]
  %v38 = vld [vmem:[#allocation2 + $0x8] sm:$0xff]
  %v39 = vld [vmem:[#allocation2 + $0x10] sm:$0xff]
  %v40 = vld [vmem:[#allocation2 + $0x18] sm:$0xff]
  %v41 = vld [vmem:[#allocation2 + $0x20] sm:$0xff]
  %v42 = vld [vmem:[#allocation2 + $0x28] sm:$0xff]
  %v43 = vld [vmem:[#allocation2 + $0x30] sm:$0xff]
  %v44 = vld [vmem:[#allocation2 + $0x38] sm:$0xff]
  %v45 = vld [vmem:[#allocation2 + $0x40] sm:$0xff]
  %v46 = vld [vmem:[#allocation2 + $0x48] sm:$0xff]
  %v47 = vld [vmem:[#allocation2 + $0x50] sm:$0xff]
  %v48 = vld [vmem:[#allocation2 + $0x58] sm:$0xff]
  %v49 = vld [vmem:[#allocation2 + $0x60] sm:$0xff]
  %v50 = vld [vmem:[#allocation2 + $0x68] sm:$0xff]
  %v51 = vld [vmem:[#allocation2 + $0x70] sm:$0xff]
  %v52 = vld [vmem:[#allocation2 + $0x78] sm:$0xff]
  %v53 = vld [vmem:[%s0] sm:$0xf]
  %v54 = vld [vmem:[%s0 + $0x4] sm:$0xf]
  %v55 = vld [vmem:[%s0 + $0x8] sm:$0xf]
  %v56 = vld [vmem:[%s0 + $0xc] sm:$0xf]
  %v57 = vld [vmem:[%s0 + $0x10] sm:$0xf]
  %v58 = vld [vmem:[%s0 + $0x14] sm:$0xf]
  %v59 = vld [vmem:[%s0 + $0x18] sm:$0xf]
  %v60 = vld [vmem:[%s0 + $0x1c] sm:$0xf]
  %v61 = vld [vmem:[%s0 + $0x20] sm:$0xf]
  %v62 = vld [vmem:[%s0 + $0x24] sm:$0xf]
  %v63 = vld [vmem:[%s0 + $0x28] sm:$0xf]
  %v64 = vld [vmem:[%s0 + $0x2c] sm:$0xf]
  %v65 = vld [vmem:[%s0 + $0x30] sm:$0xf]
  %v66 = vld [vmem:[%s0 + $0x34] sm:$0xf]
  %v67 = vld [vmem:[%s0 + $0x38] sm:$0xf]
  %v68 = vld [vmem:[%s0 + $0x3c] sm:$0xf]
  %v69 = vld [vmem:[%s1] sm:$0xf]
  %v70 = vld [vmem:[%s1 + $0x4] sm:$0xf]
  %v71 = vld [vmem:[%s1 + $0x8] sm:$0xf]
  %v72 = vld [vmem:[%s1 + $0xc] sm:$0xf]
  %v73 = vld [vmem:[%s1 + $0x10] sm:$0xf]
  %v74 = vld [vmem:[%s1 + $0x14] sm:$0xf]
  %v75 = vld [vmem:[%s1 + $0x18] sm:$0xf]
  %v76 = vld [vmem:[%s1 + $0x1c] sm:$0xf]
  %v77 = vld [vmem:[%s1 + $0x20] sm:$0xf]
  %v78 = vld [vmem:[%s1 + $0x24] sm:$0xf]
  %v79 = vld [vmem:[%s1 + $0x28] sm:$0xf]
  %v80 = vld [vmem:[%s1 + $0x2c] sm:$0xf]
  %v81 = vld [vmem:[%s1 + $0x30] sm:$0xf]
  %v82 = vld [vmem:[%s1 + $0x34] sm:$0xf]
  %v83 = vld [vmem:[%s1 + $0x38] sm:$0xf]
  %v84 = vld [vmem:[%s1 + $0x3c] sm:$0xf]
  %v101 = vunpack.c.l.b16 %v53
  %v102 = vunpack.c.l.b16 %v54
  %v103 = vunpack.c.l.b16 %v55
  %v104 = vunpack.c.l.b16 %v56
  %v105 = vunpack.c.l.b16 %v57
  %v106 = vunpack.c.l.b16 %v58
  %v107 = vunpack.c.l.b16 %v59
  %v108 = vunpack.c.l.b16 %v60
  %v109 = vunpack.c.l.b16 %v61
  %v110 = vunpack.c.l.b16 %v62
  %v111 = vunpack.c.l.b16 %v63
  %v112 = vunpack.c.l.b16 %v64
  %v113 = vunpack.c.l.b16 %v65
  %v114 = vunpack.c.l.b16 %v66
  %v115 = vunpack.c.l.b16 %v67
  %v116 = vunpack.c.l.b16 %v68
  %v117 = vpack.c.b16 %v102, %v101
  %v118 = vpack.c.b16 %v104, %v103
  %v119 = vpack.c.b16 %v106, %v105
  %v120 = vpack.c.b16 %v108, %v107
  %v121 = vpack.c.b16 %v110, %v109
  %v122 = vpack.c.b16 %v112, %v111
  %v123 = vpack.c.b16 %v114, %v113
  %v124 = vpack.c.b16 %v116, %v115
  %v149 = vunpack.c.l.b16 %v69
  %v150 = vunpack.c.l.b16 %v70
  %v151 = vunpack.c.l.b16 %v71
  %v152 = vunpack.c.l.b16 %v72
  %v153 = vunpack.c.l.b16 %v73
  %v154 = vunpack.c.l.b16 %v74
  %v155 = vunpack.c.l.b16 %v75
  %v156 = vunpack.c.l.b16 %v76
  %v157 = vunpack.c.l.b16 %v77
  %v158 = vunpack.c.l.b16 %v78
  %v159 = vunpack.c.l.b16 %v79
  %v160 = vunpack.c.l.b16 %v80
  %v161 = vunpack.c.l.b16 %v81
  %v162 = vunpack.c.l.b16 %v82
  %v163 = vunpack.c.l.b16 %v83
  %v164 = vunpack.c.l.b16 %v84
  %v165 = vpack.c.b16 %v150, %v149
  %v166 = vpack.c.b16 %v152, %v151
  %v167 = vpack.c.b16 %v154, %v153
  %v168 = vpack.c.b16 %v156, %v155
  %v169 = vpack.c.b16 %v158, %v157
  %v170 = vpack.c.b16 %v160, %v159
  %v171 = vpack.c.b16 %v162, %v161
  %v172 = vpack.c.b16 %v164, %v163
  %181 = vmatpush.bf16.msra.mxu0 %v172
  %182 = vmatpush.bf16.msra.mxu0 %v171
  %183 = vmatpush.bf16.msra.mxu0 %v170
  %184 = vmatpush.bf16.msra.mxu0 %v169
  %185 = vmatpush.bf16.msra.mxu0 %v168
  %186 = vmatpush.bf16.msra.mxu0 %v167
  %187 = vmatpush.bf16.msra.mxu0 %v166
  %188 = vmatpush.bf16.msra.mxu0 %v165
  %189 = vmatmul.bf16.gmra.mxu0 %v117
  %v190 = vpop.f32.mrf.mxu0
  %v191 = vadd.f32 0.0, %v190
  %v192 = vpop.f32.mrf.mxu0
  %v193 = vadd.f32 0.0, %v192
  %194 = vmatmul.bf16.gmra.mxu0 %v118
  %v195 = vpop.f32.mrf.mxu0
  %v196 = vadd.f32 0.0, %v195
  %v197 = vpop.f32.mrf.mxu0
  %v198 = vadd.f32 0.0, %v197
  %199 = vmatmul.bf16.gmra.mxu0 %v119
  %v200 = vpop.f32.mrf.mxu0
  %v201 = vadd.f32 0.0, %v200
  %v202 = vpop.f32.mrf.mxu0
  %v203 = vadd.f32 0.0, %v202
  %204 = vmatmul.bf16.gmra.mxu0 %v120
  %v205 = vpop.f32.mrf.mxu0
  %v206 = vadd.f32 0.0, %v205
  %v207 = vpop.f32.mrf.mxu0
  %v208 = vadd.f32 0.0, %v207
  %209 = vmatmul.bf16.gmra.mxu0 %v121
  %v210 = vpop.f32.mrf.mxu0
  %v211 = vadd.f32 0.0, %v210
  %v212 = vpop.f32.mrf.mxu0
  %v213 = vadd.f32 0.0, %v212
  %214 = vmatmul.bf16.gmra.mxu0 %v122
  %v215 = vpop.f32.mrf.mxu0
  %v216 = vadd.f32 0.0, %v215
  %v217 = vpop.f32.mrf.mxu0
  %v218 = vadd.f32 0.0, %v217
  %219 = vmatmul.bf16.gmra.mxu0 %v123
  %v220 = vpop.f32.mrf.mxu0
  %v221 = vadd.f32 0.0, %v220
  %v222 = vpop.f32.mrf.mxu0
  %v223 = vadd.f32 0.0, %v222
  %224 = vmatmul.bf16.gmra.mxu0 %v124
  %v225 = vpop.f32.mrf.mxu0
  %v226 = vadd.f32 0.0, %v225
  %v227 = vpop.f32.mrf.mxu0
  %v228 = vadd.f32 0.0, %v227
  %229 = vdwg.mxu0
  %v230 = vadd.f32 %v37, %v191
  %v231 = vadd.f32 %v38, %v193
  %v232 = vadd.f32 %v39, %v196
  %v233 = vadd.f32 %v40, %v198
  %v234 = vadd.f32 %v41, %v201
  %v235 = vadd.f32 %v42, %v203
  %v236 = vadd.f32 %v43, %v206
  %v237 = vadd.f32 %v44, %v208
  %v238 = vadd.f32 %v45, %v211
  %v239 = vadd.f32 %v46, %v213
  %v240 = vadd.f32 %v47, %v216
  %v241 = vadd.f32 %v48, %v218
  %v242 = vadd.f32 %v49, %v221
  %v243 = vadd.f32 %v50, %v223
  %v244 = vadd.f32 %v51, %v226
  %v245 = vadd.f32 %v52, %v228
  %246 = vst [vmem:[#allocation2] sm:$0xff] %v230
  %247 = vst [vmem:[#allocation2 + $0x8] sm:$0xff] %v231
  %248 = vst [vmem:[#allocation2 + $0x10] sm:$0xff] %v232
  %249 = vst [vmem:[#allocation2 + $0x18] sm:$0xff] %v233
  %250 = vst [vmem:[#allocation2 + $0x20] sm:$0xff] %v234
  %251 = vst [vmem:[#allocation2 + $0x28] sm:$0xff] %v235
  %252 = vst [vmem:[#allocation2 + $0x30] sm:$0xff] %v236
  %253 = vst [vmem:[#allocation2 + $0x38] sm:$0xff] %v237
  %254 = vst [vmem:[#allocation2 + $0x40] sm:$0xff] %v238
  %255 = vst [vmem:[#allocation2 + $0x48] sm:$0xff] %v239
  %256 = vst [vmem:[#allocation2 + $0x50] sm:$0xff] %v240
  %257 = vst [vmem:[#allocation2 + $0x58] sm:$0xff] %v241
  %258 = vst [vmem:[#allocation2 + $0x60] sm:$0xff] %v242
  %259 = vst [vmem:[#allocation2 + $0x68] sm:$0xff] %v243
  %260 = vst [vmem:[#allocation2 + $0x70] sm:$0xff] %v244
  %261 = vst [vmem:[#allocation2 + $0x78] sm:$0xff] %v245
  // Predicated region
  $region22: #{vgcn_encoder_pallas.4} parent=0 // pred_check
    %p262 = pneg %p17
  $region23: #{vgcn_encoder_pallas.4} parent=0 // pred_check_branch
    %264 = sbr.rel (%p262) target = $region25
  $region24: #{vgcn_encoder_pallas.4} parent=0 // pred_region
    %v265 = vld [vmem:[#allocation2] sm:$0xff]
    %v266 = vld [vmem:[#allocation2 + $0x8] sm:$0xff]
    %v267 = vld [vmem:[#allocation2 + $0x10] sm:$0xff]
    %v268 = vld [vmem:[#allocation2 + $0x18] sm:$0xff]
    %v269 = vld [vmem:[#allocation2 + $0x20] sm:$0xff]
    %v270 = vld [vmem:[#allocation2 + $0x28] sm:$0xff]
    %v271 = vld [vmem:[#allocation2 + $0x30] sm:$0xff]
    %v272 = vld [vmem:[#allocation2 + $0x38] sm:$0xff]
    %v273 = vld [vmem:[#allocation2 + $0x40] sm:$0xff]
    %v274 = vld [vmem:[#allocation2 + $0x48] sm:$0xff]
    %v275 = vld [vmem:[#allocation2 + $0x50] sm:$0xff]
    %v276 = vld [vmem:[#allocation2 + $0x58] sm:$0xff]
    %v277 = vld [vmem:[#allocation2 + $0x60] sm:$0xff]
    %v278 = vld [vmem:[#allocation2 + $0x68] sm:$0xff]
    %v279 = vld [vmem:[#allocation2 + $0x70] sm:$0xff]
    %v280 = vld [vmem:[#allocation2 + $0x78] sm:$0xff]
    %v281 = vld [vmem:[%s2] sm:$0x1]
    %v283 = vperm.slane %v281, 0
    %v285 = vadd.f32 %v265, %v283
    %v286 = vadd.f32 %v266, %v283
    %v287 = vadd.f32 %v267, %v283
    %v288 = vadd.f32 %v268, %v283
    %v289 = vadd.f32 %v269, %v283
    %v290 = vadd.f32 %v270, %v283
    %v291 = vadd.f32 %v271, %v283
    %v292 = vadd.f32 %v272, %v283
    %v293 = vadd.f32 %v273, %v283
    %v294 = vadd.f32 %v274, %v283
    %v295 = vadd.f32 %v275, %v283
    %v296 = vadd.f32 %v276, %v283
    %v297 = vadd.f32 %v277, %v283
    %v298 = vadd.f32 %v278, %v283
    %v299 = vadd.f32 %v279, %v283
    %v300 = vadd.f32 %v280, %v283
    %v301 = vmax.f32 %v285, 0.0
    %v302 = vmax.f32 %v286, 0.0
    %v303 = vmax.f32 %v287, 0.0
    %v304 = vmax.f32 %v288, 0.0
    %v305 = vmax.f32 %v289, 0.0
    %v306 = vmax.f32 %v290, 0.0
    %v307 = vmax.f32 %v291, 0.0
    %v308 = vmax.f32 %v292, 0.0
    %v309 = vmax.f32 %v293, 0.0
    %v310 = vmax.f32 %v294, 0.0
    %v311 = vmax.f32 %v295, 0.0
    %v312 = vmax.f32 %v296, 0.0
    %v313 = vmax.f32 %v297, 0.0
    %v314 = vmax.f32 %v298, 0.0
    %v315 = vmax.f32 %v299, 0.0
    %v316 = vmax.f32 %v300, 0.0
    %v317 = vpack.c.bf16 %v302, %v301
    %v318 = vpack.c.bf16 %v304, %v303
    %v319 = vpack.c.bf16 %v306, %v305
    %v320 = vpack.c.bf16 %v308, %v307
    %v321 = vpack.c.bf16 %v310, %v309
    %v322 = vpack.c.bf16 %v312, %v311
    %v323 = vpack.c.bf16 %v314, %v313
    %v324 = vpack.c.bf16 %v316, %v315
    %v325 = vld [vmem:[%s3] sm:$0xf]
    %v326 = vld [vmem:[%s3 + $0x4] sm:$0xf]
    %v327 = vld [vmem:[%s3 + $0x8] sm:$0xf]
    %v328 = vld [vmem:[%s3 + $0xc] sm:$0xf]
    %v329 = vld [vmem:[%s3 + $0x10] sm:$0xf]
    %v330 = vld [vmem:[%s3 + $0x14] sm:$0xf]
    %v331 = vld [vmem:[%s3 + $0x18] sm:$0xf]
    %v332 = vld [vmem:[%s3 + $0x1c] sm:$0xf]
    %v333 = vld [vmem:[%s3 + $0x20] sm:$0xf]
    %v334 = vld [vmem:[%s3 + $0x24] sm:$0xf]
    %v335 = vld [vmem:[%s3 + $0x28] sm:$0xf]
    %v336 = vld [vmem:[%s3 + $0x2c] sm:$0xf]
    %v337 = vld [vmem:[%s3 + $0x30] sm:$0xf]
    %v338 = vld [vmem:[%s3 + $0x34] sm:$0xf]
    %v339 = vld [vmem:[%s3 + $0x38] sm:$0xf]
    %v340 = vld [vmem:[%s3 + $0x3c] sm:$0xf]
    %v357 = vunpack.c.l.b16 %v325
    %v358 = vunpack.c.l.b16 %v326
    %v359 = vunpack.c.l.b16 %v327
    %v360 = vunpack.c.l.b16 %v328
    %v361 = vunpack.c.l.b16 %v329
    %v362 = vunpack.c.l.b16 %v330
    %v363 = vunpack.c.l.b16 %v331
    %v364 = vunpack.c.l.b16 %v332
    %v365 = vunpack.c.l.b16 %v333
    %v366 = vunpack.c.l.b16 %v334
    %v367 = vunpack.c.l.b16 %v335
    %v368 = vunpack.c.l.b16 %v336
    %v369 = vunpack.c.l.b16 %v337
    %v370 = vunpack.c.l.b16 %v338
    %v371 = vunpack.c.l.b16 %v339
    %v372 = vunpack.c.l.b16 %v340
    %v373 = vpack.c.b16 %v358, %v357
    %v374 = vpack.c.b16 %v360, %v359
    %v375 = vpack.c.b16 %v362, %v361
    %v376 = vpack.c.b16 %v364, %v363
    %v377 = vpack.c.b16 %v366, %v365
    %v378 = vpack.c.b16 %v368, %v367
    %v379 = vpack.c.b16 %v370, %v369
    %v380 = vpack.c.b16 %v372, %v371
    %389 = vmatpush.bf16.msra.mxu0 %v380
    %390 = vmatpush.bf16.msra.mxu0 %v379
    %391 = vmatpush.bf16.msra.mxu0 %v378
    %392 = vmatpush.bf16.msra.mxu0 %v377
    %393 = vmatpush.bf16.msra.mxu0 %v376
    %394 = vmatpush.bf16.msra.mxu0 %v375
    %395 = vmatpush.bf16.msra.mxu0 %v374
    %396 = vmatpush.bf16.msra.mxu0 %v373
    %397 = vmatmul.bf16.gmra.mxu0 %v317
    %v398 = vpop.f32.mrf.mxu0
    %v399 = vadd.f32 0.0, %v398
    %v400 = vpop.f32.mrf.mxu0
    %v401 = vadd.f32 0.0, %v400
    %402 = vmatmul.bf16.gmra.mxu0 %v318
    %v403 = vpop.f32.mrf.mxu0
    %v404 = vadd.f32 0.0, %v403
    %v405 = vpop.f32.mrf.mxu0
    %v406 = vadd.f32 0.0, %v405
    %407 = vmatmul.bf16.gmra.mxu0 %v319
    %v408 = vpop.f32.mrf.mxu0
    %v409 = vadd.f32 0.0, %v408
    %v410 = vpop.f32.mrf.mxu0
    %v411 = vadd.f32 0.0, %v410
    %412 = vmatmul.bf16.gmra.mxu0 %v320
    %v413 = vpop.f32.mrf.mxu0
    %v414 = vadd.f32 0.0, %v413
    %v415 = vpop.f32.mrf.mxu0
    %v416 = vadd.f32 0.0, %v415
    %417 = vmatmul.bf16.gmra.mxu0 %v321
    %v418 = vpop.f32.mrf.mxu0
    %v419 = vadd.f32 0.0, %v418
    %v420 = vpop.f32.mrf.mxu0
    %v421 = vadd.f32 0.0, %v420
    %422 = vmatmul.bf16.gmra.mxu0 %v322
    %v423 = vpop.f32.mrf.mxu0
    %v424 = vadd.f32 0.0, %v423
    %v425 = vpop.f32.mrf.mxu0
    %v426 = vadd.f32 0.0, %v425
    %427 = vmatmul.bf16.gmra.mxu0 %v323
    %v428 = vpop.f32.mrf.mxu0
    %v429 = vadd.f32 0.0, %v428
    %v430 = vpop.f32.mrf.mxu0
    %v431 = vadd.f32 0.0, %v430
    %432 = vmatmul.bf16.gmra.mxu0 %v324
    %v433 = vpop.f32.mrf.mxu0
    %v434 = vadd.f32 0.0, %v433
    %v435 = vpop.f32.mrf.mxu0
    %v436 = vadd.f32 0.0, %v435
    %437 = vdwg.mxu0
    %v438 = vpack.c.bf16 %v399, %v399
    %v439 = vpack.c.bf16 %v401, %v401
    %v440 = vpack.c.bf16 %v404, %v404
    %v441 = vpack.c.bf16 %v406, %v406
    %v442 = vpack.c.bf16 %v409, %v409
    %v443 = vpack.c.bf16 %v411, %v411
    %v444 = vpack.c.bf16 %v414, %v414
    %v445 = vpack.c.bf16 %v416, %v416
    %v446 = vpack.c.bf16 %v419, %v419
    %v447 = vpack.c.bf16 %v421, %v421
    %v448 = vpack.c.bf16 %v424, %v424
    %v449 = vpack.c.bf16 %v426, %v426
    %v450 = vpack.c.bf16 %v429, %v429
    %v451 = vpack.c.bf16 %v431, %v431
    %v452 = vpack.c.bf16 %v434, %v434
    %v453 = vpack.c.bf16 %v436, %v436
    %454 = vst [vmem:[%s4] sm:$0xf] %v438
    %455 = vst [vmem:[%s4 + $0x4] sm:$0xf] %v439
    %456 = vst [vmem:[%s4 + $0x8] sm:$0xf] %v440
    %457 = vst [vmem:[%s4 + $0xc] sm:$0xf] %v441
    %458 = vst [vmem:[%s4 + $0x10] sm:$0xf] %v442
    %459 = vst [vmem:[%s4 + $0x14] sm:$0xf] %v443
    %460 = vst [vmem:[%s4 + $0x18] sm:$0xf] %v444
    %461 = vst [vmem:[%s4 + $0x1c] sm:$0xf] %v445
    %462 = vst [vmem:[%s4 + $0x20] sm:$0xf] %v446
    %463 = vst [vmem:[%s4 + $0x24] sm:$0xf] %v447
    %464 = vst [vmem:[%s4 + $0x28] sm:$0xf] %v448
    %465 = vst [vmem:[%s4 + $0x2c] sm:$0xf] %v449
    %466 = vst [vmem:[%s4 + $0x30] sm:$0xf] %v450
    %467 = vst [vmem:[%s4 + $0x34] sm:$0xf] %v451
    %468 = vst [vmem:[%s4 + $0x38] sm:$0xf] %v452
    %469 = vst [vmem:[%s4 + $0x3c] sm:$0xf] %v453
  $region25: #{vgcn_encoder_pallas.4} parent=0 // pred_fallthru
    _
  // Predicated region
  $region26: #{vgcn_encoder_pallas.4} parent=0 // pred_check
    _
  $region27: #{vgcn_encoder_pallas.4} parent=0 // pred_check_branch
    %471 = sbr.rel (0) target = $region29
  $region28: #{vgcn_encoder_pallas.4} parent=0 // pred_region
    _
  $region29: #{vgcn_encoder_pallas.4} parent=0 // pred_fallthru
    _
  // Predicated region
  $region30: #{vgcn_encoder_pallas.4} parent=0 // pred_check
    _
  $region31: #{vgcn_encoder_pallas.4} parent=0 // pred_check_branch
    %473 = sbr.rel (0) target = $region33
  $region32: #{vgcn_encoder_pallas.4} parent=0 // pred_region
    _
  $region33: #{vgcn_encoder_pallas.4} parent=0 // pred_fallthru
    _

</llo_original>
